<compile_context>
chip_gen: v6e
topology: v6e:2x2x1
jax: 0.10.0
libtpu: 0.0.40
codegen_flags: <defaults>
</compile_context>

<pallas_src>
import functools

import jax
import jax.numpy as jnp
from jax.experimental import pallas as pl
from jax.experimental.pallas import tpu as pltpu


def _round_up(x, m):
    return (x + m - 1) // m * m


def _mlp_kernel(obs_ref, w1_ref, b1_ref, w2_ref, b2_ref, w3_ref, b3_ref,
                mean_ref):
    """One batch tile: 3 MXU matmuls; bias add + ReLU in f32; lane-dense store."""
    cd = w1_ref.dtype                                   # MXU operand dtype

    h1 = jnp.dot(obs_ref[...], w1_ref[...], preferred_element_type=jnp.float32)
    h1 = jnp.maximum(h1 + b1_ref[...], 0.0).astype(cd)          # (TB, HP)

    h2 = jnp.dot(h1, w2_ref[...], preferred_element_type=jnp.float32)
    h2 = jnp.maximum(h2 + b2_ref[...], 0.0).astype(cd)          # (TB, HP)

    mean = jnp.dot(h2, w3_ref[...], preferred_element_type=jnp.float32)
    mean_ref[...] = (mean + b3_ref[...]).astype(mean_ref.dtype)  # (TB, AP)


def prepare_params(params, compute_dtype=jnp.bfloat16):
    """Pad feature dims to lane multiples and cast MXU operands ONCE.

    Done outside the per-call jitted forward so the pad/cast prologue is not
    re-executed (and re-streamed through HBM) on every generation step.
    Zero padding is mathematically inert; biases stay f32 because bias add /
    ReLU run in f32 inside the kernel (also avoids bf16 VPU ops on v5e).
    """
    w1, b1, w2, b2, w3, b3, log_std = params
    obs_dim, H = w1.shape
    A = w3.shape[1]
    HP = _round_up(H, 128)
    AP = _round_up(A, 128)
    cd = jnp.dtype(compute_dtype)
    f32 = jnp.float32

    w1_p = jnp.zeros((obs_dim, HP), cd).at[:, :H].set(w1.astype(cd))
    b1_p = jnp.zeros((1, HP), f32).at[0, :H].set(b1.astype(f32))
    w2_p = jnp.zeros((HP, HP), cd).at[:H, :H].set(w2.astype(cd))
    b2_p = jnp.zeros((1, HP), f32).at[0, :H].set(b2.astype(f32))
    w3_p = jnp.zeros((HP, AP), cd).at[:H, :A].set(w3.astype(cd))
    b3_p = jnp.zeros((1, AP), f32).at[0, :A].set(b3.astype(f32))
    std = jnp.exp(log_std.astype(f32))     # batch independent -> computed once
    return (w1_p, b1_p, w2_p, b2_p, w3_p, b3_p, std)


@functools.partial(jax.jit, static_argnames=("batch_tile",))
def net_continuous_actions_forward(obs, prepared, *, batch_tile=1024):
    """Returns (mean, std) exactly like the PyTorch module's forward."""
    w1_p, b1_p, w2_p, b2_p, w3_p, b3_p, std = prepared
    B, obs_dim = obs.shape
    assert w1_p.shape[0] == obs_dim, "prepared params do not match obs_dim"
    HP = w1_p.shape[1]
    AP = w3_p.shape[1]
    A = std.shape[0]
    cd = w1_p.dtype

    # Batch tile: sublane-aligned for the compute dtype (8 rows f32, 16 bf16),
    # capped so the (parallel) batch grid has >= 2 steps whenever possible so
    # both v7x TensorCores get a tile; single-TC v5e/v6e are unaffected.
    row_align = max(8, 32 // cd.itemsize)
    b_align = _round_up(B, row_align)
    two_step_cap = max(row_align, _round_up(pl.cdiv(b_align, 2), row_align))
    TB = max(row_align,
             min(_round_up(batch_tile, row_align), b_align, two_step_cap))
    BP = _round_up(B, TB)
    grid = (BP // TB,)

    # obs stays feature-unpadded (block last dim == full array dim is legal):
    # no 8x inflation of the dominant HBM stream, no extra padded-copy HBM
    # round trip. Only pad batch rows when B is not already a tile multiple.
    obs_c = obs.astype(cd)
    if BP != B:
        obs_c = jnp.pad(obs_c, ((0, BP - B), (0, 0)))

    # Cost estimate for the work the kernel actually performs.
    w_bytes = (w1_p.size * w1_p.dtype.itemsize
               + w2_p.size * w2_p.dtype.itemsize
               + w3_p.size * w3_p.dtype.itemsize)
    b_bytes = 4 * (b1_p.size + b2_p.size + b3_p.size)
    cost = pl.CostEstimate(
        flops=2 * BP * (obs_dim * HP + HP * HP + HP * AP),
        transcendentals=0,
        bytes_accessed=(BP * obs_dim * cd.itemsize      # obs in
                        + BP * AP * 4                   # mean out
                        + w_bytes + b_bytes),           # resident params
    )

    mean_p = pl.pallas_call(
        _mlp_kernel,
        out_shape=jax.ShapeDtypeStruct((BP, AP), jnp.float32),
        grid=grid,
        in_specs=[
            # obs: tiled over the (parallel) batch grid axis, feature-unpadded.
            pl.BlockSpec((TB, obs_dim), lambda i: (i, 0)),
            # Weights / biases: constant index_map -> VMEM-resident across
            # batch tiles (no re-DMA per grid step).
            pl.BlockSpec((obs_dim, HP), lambda i: (0, 0)),
            pl.BlockSpec((1, HP), lambda i: (0, 0)),
            pl.BlockSpec((HP, HP), lambda i: (0, 0)),
            pl.BlockSpec((1, HP), lambda i: (0, 0)),
            pl.BlockSpec((HP, AP), lambda i: (0, 0)),
            pl.BlockSpec((1, AP), lambda i: (0, 0)),
        ],
        out_specs=pl.BlockSpec((TB, AP), lambda i: (i, 0)),
        compiler_params=pltpu.CompilerParams(
            dimension_semantics=("parallel",),
        ),
        cost_estimate=cost,
    )(obs_c, w1_p, b1_p, w2_p, b2_p, w3_p, b3_p)

    mean = mean_p[:B, :A]
    return mean, std


def init_params(key, obs_dim, hidden_size, act_dim):
    """Deterministic init mimicking torch.nn.Linear default (U[-1/sqrt(fan_in), +])."""
    ks = jax.random.split(key, 6)

    def linear(kw, kb, fan_in, fan_out):
        bound = 1.0 / jnp.sqrt(fan_in)
        w = jax.random.uniform(kw, (fan_in, fan_out), jnp.float32, -bound, bound)
        b = jax.random.uniform(kb, (fan_out,), jnp.float32, -bound, bound)
        return w, b

    w1, b1 = linear(ks[0], ks[1], obs_dim, hidden_size)
    w2, b2 = linear(ks[2], ks[3], hidden_size, hidden_size)
    w3, b3 = linear(ks[4], ks[5], hidden_size, act_dim)
    log_std = jnp.zeros((act_dim,), jnp.float32)   # nn.Parameter(torch.zeros(act_dim))
    return (w1, b1, w2, b2, w3, b3, log_std)


def _reference(obs, params):
    w1, b1, w2, b2, w3, b3, log_std = params
    h1 = jnp.maximum(obs @ w1 + b1, 0.0)
    h2 = jnp.maximum(h1 @ w2 + b2, 0.0)
    return h2 @ w3 + b3, jnp.exp(log_std)


if __name__ == "__main__":
    obs_dim, hidden_size, act_dim = 16, 32, 8

    key = jax.random.PRNGKey(0)
    kp, kx1, kx2 = jax.random.split(key, 3)
    params = init_params(kp, obs_dim, hidden_size, act_dim)

    # One-time prologue (pad + cast), cached alongside the params.
    prepared_f32 = prepare_params(params, compute_dtype=jnp.float32)
    prepared_bf16 = prepare_params(params, compute_dtype=jnp.bfloat16)

    # Case 1: tiny batch, single grid step, f32 compute path (tight tolerance).
    batch = 4
    obs = jax.random.normal(kx1, (batch, obs_dim), jnp.float32)
    mean, std = net_continuous_actions_forward(obs, prepared_f32)
    jax.block_until_ready((mean, std))

    mean_ref, std_ref = _reference(obs, params)
    assert mean.shape == (batch, act_dim) and std.shape == (act_dim,)
    assert jnp.allclose(mean, mean_ref, atol=1e-5, rtol=1e-5)
    assert jnp.allclose(std, std_ref, atol=1e-6, rtol=1e-6)

    # Case 2: batch larger than the tile -> multi-step parallel grid, bf16 MXU
    # operands (f32 accumulation / bias / ReLU) -> looser tolerance vs f32 ref.
    batch2 = 20
    obs2 = jax.random.normal(kx2, (batch2, obs_dim), jnp.float32)
    mean2, std2 = net_continuous_actions_forward(obs2, prepared_bf16,
                                                 batch_tile=8)
    jax.block_until_ready((mean2, std2))

    mean2_ref, std2_ref = _reference(obs2, params)
    assert mean2.shape == (batch2, act_dim) and std2.shape == (act_dim,)
    assert jnp.allclose(mean2, mean2_ref, atol=5e-2, rtol=5e-2)
    assert jnp.allclose(std2, std2_ref, atol=1e-6, rtol=1e-6)

    print("KERNEL_OK")
</pallas_src>

<mosaic_0001>
module attributes {stable_mosaic.version = 11 : i64} {
  func.func @_mlp_kernel(%arg0: i32, %arg1: memref<8x16xf32, #tpu.memory_space<vmem>>, %arg2: memref<16x128xf32, #tpu.memory_space<vmem>>, %arg3: memref<1x128xf32, #tpu.memory_space<vmem>>, %arg4: memref<128x128xf32, #tpu.memory_space<vmem>>, %arg5: memref<1x128xf32, #tpu.memory_space<vmem>>, %arg6: memref<128x128xf32, #tpu.memory_space<vmem>>, %arg7: memref<1x128xf32, #tpu.memory_space<vmem>>, %arg8: memref<8x128xf32, #tpu.memory_space<vmem>>) attributes {dimension_semantics = [#tpu.dimension_semantics<parallel>], iteration_bounds = array<i64: 1>, scalar_prefetch = 0 : i64, scratch_operands = 0 : i64, tpu.core_type = #tpu.core_type<tc>, window_params = [{transform_indices = @transform_0, window_bounds = array<i64: 8, 16>}, {pipeline_mode = #tpu.pipeline_mode<synchronous>, transform_indices = @transform_1, window_bounds = array<i64: 16, 128>}, {pipeline_mode = #tpu.pipeline_mode<synchronous>, transform_indices = @transform_2, window_bounds = array<i64: 1, 128>}, {pipeline_mode = #tpu.pipeline_mode<synchronous>, transform_indices = @transform_3, window_bounds = array<i64: 128, 128>}, {pipeline_mode = #tpu.pipeline_mode<synchronous>, transform_indices = @transform_4, window_bounds = array<i64: 1, 128>}, {pipeline_mode = #tpu.pipeline_mode<synchronous>, transform_indices = @transform_5, window_bounds = array<i64: 128, 128>}, {pipeline_mode = #tpu.pipeline_mode<synchronous>, transform_indices = @transform_6, window_bounds = array<i64: 1, 128>}, {transform_indices = @transform_7, window_bounds = array<i64: 8, 128>}]} {
    %c0 = arith.constant 0 : index
    %c0_0 = arith.constant 0 : index
    %0 = vector.load %arg1[%c0, %c0_0] : memref<8x16xf32, #tpu.memory_space<vmem>>, vector<8x16xf32>
    %c0_1 = arith.constant 0 : index
    %c0_2 = arith.constant 0 : index
    %1 = vector.load %arg2[%c0_1, %c0_2] : memref<16x128xf32, #tpu.memory_space<vmem>>, vector<16x128xf32>
    %cst = arith.constant dense<0.000000e+00> : vector<8x128xf32>
    %2 = tpu.matmul %0, %1, %cst {dimension_numbers = #tpu.dot_dimension_numbers<[1], [0], [0], [1], [0, 0, 1, 1], [], []>} : vector<8x16xf32>, vector<16x128xf32>, vector<8x128xf32> -> vector<8x128xf32>
    %c0_3 = arith.constant 0 : index
    %c0_4 = arith.constant 0 : index
    %3 = vector.load %arg3[%c0_3, %c0_4] : memref<1x128xf32, #tpu.memory_space<vmem>>, vector<1x128xf32>
    %4 = vector.broadcast %3 : vector<1x128xf32> to vector<8x128xf32>
    %5 = arith.addf %2, %4 : vector<8x128xf32>
    %cst_5 = arith.constant 0.000000e+00 : f32
    %6 = vector.broadcast %cst_5 : f32 to vector<8x128xf32>
    %7 = arith.maximumf %5, %6 : vector<8x128xf32>
    %c0_6 = arith.constant 0 : index
    %c0_7 = arith.constant 0 : index
    %8 = vector.load %arg4[%c0_6, %c0_7] : memref<128x128xf32, #tpu.memory_space<vmem>>, vector<128x128xf32>
    %cst_8 = arith.constant dense<0.000000e+00> : vector<8x128xf32>
    %9 = tpu.matmul %7, %8, %cst_8 {dimension_numbers = #tpu.dot_dimension_numbers<[1], [0], [0], [1], [0, 0, 1, 1], [], []>} : vector<8x128xf32>, vector<128x128xf32>, vector<8x128xf32> -> vector<8x128xf32>
    %c0_9 = arith.constant 0 : index
    %c0_10 = arith.constant 0 : index
    %10 = vector.load %arg5[%c0_9, %c0_10] : memref<1x128xf32, #tpu.memory_space<vmem>>, vector<1x128xf32>
    %11 = vector.broadcast %10 : vector<1x128xf32> to vector<8x128xf32>
    %12 = arith.addf %9, %11 : vector<8x128xf32>
    %cst_11 = arith.constant 0.000000e+00 : f32
    %13 = vector.broadcast %cst_11 : f32 to vector<8x128xf32>
    %14 = arith.maximumf %12, %13 : vector<8x128xf32>
    %c0_12 = arith.constant 0 : index
    %c0_13 = arith.constant 0 : index
    %15 = vector.load %arg6[%c0_12, %c0_13] : memref<128x128xf32, #tpu.memory_space<vmem>>, vector<128x128xf32>
    %cst_14 = arith.constant dense<0.000000e+00> : vector<8x128xf32>
    %16 = tpu.matmul %14, %15, %cst_14 {dimension_numbers = #tpu.dot_dimension_numbers<[1], [0], [0], [1], [0, 0, 1, 1], [], []>} : vector<8x128xf32>, vector<128x128xf32>, vector<8x128xf32> -> vector<8x128xf32>
    %c0_15 = arith.constant 0 : index
    %c0_16 = arith.constant 0 : index
    %17 = vector.load %arg7[%c0_15, %c0_16] : memref<1x128xf32, #tpu.memory_space<vmem>>, vector<1x128xf32>
    %18 = vector.broadcast %17 : vector<1x128xf32> to vector<8x128xf32>
    %19 = arith.addf %16, %18 : vector<8x128xf32>
    %c0_17 = arith.constant 0 : index
    %c0_18 = arith.constant 0 : index
    %20 = vector.load %arg8[%c0_17, %c0_18] : memref<8x128xf32, #tpu.memory_space<vmem>>, vector<8x128xf32>
    tpu.vector_store %arg8[%c0_17, %c0_18], %19 {strides = array<i32>} : memref<8x128xf32, #tpu.memory_space<vmem>>, vector<8x128xf32>,
    return
  }
  func.func @transform_0(%arg0: i32) -> (i32, i32) {
    %c0_i32 = arith.constant 0 : i32
    %c0_i32_0 = arith.constant 0 : i32
    return %arg0, %c0_i32 : i32, i32
  }
  func.func @transform_1(%arg0: i32) -> (i32, i32) {
    %c0_i32 = arith.constant 0 : i32
    %c0_i32_0 = arith.constant 0 : i32
    %c0_i32_1 = arith.constant 0 : i32
    return %c0_i32, %c0_i32_0 : i32, i32
  }
  func.func @transform_2(%arg0: i32) -> (i32, i32) {
    %c0_i32 = arith.constant 0 : i32
    %c0_i32_0 = arith.constant 0 : i32
    %c0_i32_1 = arith.constant 0 : i32
    return %c0_i32, %c0_i32_0 : i32, i32
  }
  func.func @transform_3(%arg0: i32) -> (i32, i32) {
    %c0_i32 = arith.constant 0 : i32
    %c0_i32_0 = arith.constant 0 : i32
    %c0_i32_1 = arith.constant 0 : i32
    return %c0_i32, %c0_i32_0 : i32, i32
  }
  func.func @transform_4(%arg0: i32) -> (i32, i32) {
    %c0_i32 = arith.constant 0 : i32
    %c0_i32_0 = arith.constant 0 : i32
    %c0_i32_1 = arith.constant 0 : i32
    return %c0_i32, %c0_i32_0 : i32, i32
  }
  func.func @transform_5(%arg0: i32) -> (i32, i32) {
    %c0_i32 = arith.constant 0 : i32
    %c0_i32_0 = arith.constant 0 : i32
    %c0_i32_1 = arith.constant 0 : i32
    return %c0_i32, %c0_i32_0 : i32, i32
  }
  func.func @transform_6(%arg0: i32) -> (i32, i32) {
    %c0_i32 = arith.constant 0 : i32
    %c0_i32_0 = arith.constant 0 : i32
    %c0_i32_1 = arith.constant 0 : i32
    return %c0_i32, %c0_i32_0 : i32, i32
  }
  func.func @transform_7(%arg0: i32) -> (i32, i32) {
    %c0_i32 = arith.constant 0 : i32
    %c0_i32_0 = arith.constant 0 : i32
    return %arg0, %c0_i32 : i32, i32
  }
}

</mosaic_0001>

<llo_original>
// kernel: net_continuous_actions_forward.1
$region0: #{net_continuous_actions_forward.1}
  #allocation0 [shape = 'u32[]', space=smem, size = 0x4, offset = 0x4, fixed_abs, tag = 'smem constant byte address 0x4 - core index']
  #allocation1 [shape = 'u32[144,128]{1,0:T(1,128)}', space=vmem, size = 0x12000, scoped, tag = 'internal scratch']
  %s0 = inlined_call_operand.vmem [shape: f32[8,16], index: 0, kind: input, shape index: {}]
  %s1 = inlined_call_operand.vmem [shape: f32[16,128], index: 1, kind: input, shape index: {}]
  %s2 = inlined_call_operand.vmem [shape: f32[1,128], index: 2, kind: input, shape index: {}]
  %s3 = inlined_call_operand.hbm [shape: f32[128,128], index: 3, kind: input, shape index: {}]
  %s4 = inlined_call_operand.vmem [shape: f32[1,128], index: 4, kind: input, shape index: {}]
  %s5 = inlined_call_operand.hbm [shape: f32[128,128], index: 5, kind: input, shape index: {}]
  %s6 = inlined_call_operand.vmem [shape: f32[1,128], index: 6, kind: input, shape index: {}]
  %s7 = inlined_call_operand.vmem [shape: f32[8,128], index: 7, kind: output, shape index: {}]
  %s8 = sld [smem:[#allocation0]]
  $region46: #{net_continuous_actions_forward.1} parent=0
    _
  %s10 = ssub.s32 1, %s8
  %s11 = scalar_select 0, %s10, %s8
  $region1: #{net_continuous_actions_forward.1} parent=0
    #allocation2 [shape = 'u8[65536]{0}', space=vmem, size = 0x10000, scoped, tag = 'input window, operand 3, single buffered']
    #allocation3 [shape = 's32[1]{0}', space=sflag, size = 0x4, scoped, tag = 'scoped memory for net_continuous_actions_forward.1']
    #allocation4 [shape = 'u8[65536]{0}', space=vmem, size = 0x10000, scoped, tag = 'input window, operand 5, single buffered']
    #allocation5 [shape = 's32[1]{0}', space=sflag, size = 0x4, scoped, tag = 'scoped memory for net_continuous_actions_forward.1']
    %12 = vsyncpa [#allocation3], 0
    %13 = vsyncpa [#allocation5], 0
    // Predicated region
    $region2: #{net_continuous_actions_forward.1} parent=1 // pred_check
      _
    $region3: #{net_continuous_actions_forward.1} parent=1 // pred_check_branch
      %15 = sbr.rel (0) target = $region5
    $region4: #{net_continuous_actions_forward.1} parent=1 // pred_region
      _
    $region5: #{net_continuous_actions_forward.1} parent=1 // pred_fallthru
      _
    // Predicated region
    $region6: #{net_continuous_actions_forward.1} parent=1 // pred_check
      _
    $region7: #{net_continuous_actions_forward.1} parent=1 // pred_check_branch
      %17 = sbr.rel (0) target = $region9
    $region8: #{net_continuous_actions_forward.1} parent=1 // pred_region
      _
    $region9: #{net_continuous_actions_forward.1} parent=1 // pred_fallthru
      _
    // Predicated region
    $region10: #{net_continuous_actions_forward.1} parent=1 // pred_check
      _
    $region11: #{net_continuous_actions_forward.1} parent=1 // pred_check_branch
      %19 = sbr.rel (0) target = $region13
    $region12: #{net_continuous_actions_forward.1} parent=1 // pred_region
      _
    $region13: #{net_continuous_actions_forward.1} parent=1 // pred_fallthru
      _
    // Predicated region
    $region14: #{net_continuous_actions_forward.1} parent=1 // pred_check
      _
    $region15: #{net_continuous_actions_forward.1} parent=1 // pred_check_branch
      %21 = sbr.rel (0) target = $region17
    $region16: #{net_continuous_actions_forward.1} parent=1 // pred_region
      %s23 = ssub.s32 2048, 2048
      %24 = vsyncadd [#allocation3], %s23
      %s25 = sshll.u32 [#allocation2], 4
      %s26 = int_to_ptr.vmem [resolvable:$true] %s25
      %31 = dma.hbm_to_vmem [thread:$0]  %s3, 2048, %s26, [#allocation3], 128, 128, 8
    $region17: #{net_continuous_actions_forward.1} parent=1 // pred_fallthru
      _
    // Predicated region
    $region18: #{net_continuous_actions_forward.1} parent=1 // pred_check
      _
    $region19: #{net_continuous_actions_forward.1} parent=1 // pred_check_branch
      %33 = sbr.rel (0) target = $region21
    $region20: #{net_continuous_actions_forward.1} parent=1 // pred_region
      _
    $region21: #{net_continuous_actions_forward.1} parent=1 // pred_fallthru
      _
    // Predicated region
    $region22: #{net_continuous_actions_forward.1} parent=1 // pred_check
      _
    $region23: #{net_continuous_actions_forward.1} parent=1 // pred_check_branch
      %35 = sbr.rel (0) target = $region25
    $region24: #{net_continuous_actions_forward.1} parent=1 // pred_region
      %s37 = ssub.s32 2048, 2048
      %38 = vsyncadd [#allocation5], %s37
      %s39 = sshll.u32 [#allocation4], 4
      %s40 = int_to_ptr.vmem [resolvable:$true] %s39
      %45 = dma.hbm_to_vmem [thread:$0]  %s5, 2048, %s40, [#allocation5], 128, 128, 8
    $region25: #{net_continuous_actions_forward.1} parent=1 // pred_fallthru
      _
    // Predicated region
    $region26: #{net_continuous_actions_forward.1} parent=1 // pred_check
      _
    $region27: #{net_continuous_actions_forward.1} parent=1 // pred_check_branch
      %47 = sbr.rel (0) target = $region29
    $region28: #{net_continuous_actions_forward.1} parent=1 // pred_region
      _
    $region29: #{net_continuous_actions_forward.1} parent=1 // pred_fallthru
      _
    // Predicated region
    $region30: #{net_continuous_actions_forward.1} parent=1 // pred_check
      _
    $region31: #{net_continuous_actions_forward.1} parent=1 // pred_check_branch
      %49 = sbr.rel (0) target = $region33
    $region32: #{net_continuous_actions_forward.1} parent=1 // pred_region
      %50 = dma.done [#allocation3], 2048
    $region33: #{net_continuous_actions_forward.1} parent=1 // pred_fallthru
      _
    // Predicated region
    $region34: #{net_continuous_actions_forward.1} parent=1 // pred_check
      _
    $region35: #{net_continuous_actions_forward.1} parent=1 // pred_check_branch
      %52 = sbr.rel (0) target = $region37
    $region36: #{net_continuous_actions_forward.1} parent=1 // pred_region
      %53 = dma.done [#allocation5], 2048
    $region37: #{net_continuous_actions_forward.1} parent=1 // pred_fallthru
      _
    %v54 = vld [vmem:[%s0] sm:$0xff]
    %v55 = vld [vmem:[%s1] sm:$0xff]
    %v56 = vld [vmem:[%s1 + $0x8] sm:$0xff]
    %v57 = vld [vmem:[%s2] sm:$0x1]
    %v59 = vlaneseq
    %v60 = vshrl.u32 %v59, 7
    %v61 = vsub.s32 0, %v60
    %v62 = vrot.slane %v57, %v61
    %vm64 = vcmask 130048
    %v66 = vsel %vm64, %v54, 0
    %68 = vmatprep.subr.mxu0 0.0
    %69 = vmatpush1.msra.mxu0 0.0
    %70 = vmatprep.subr.mxu0 0.0
    %71 = vmatpush1.msra.mxu0 0.0
    %72 = vmatprep.subr.mxu0 0.0
    %73 = vmatpush1.msra.mxu0 0.0
    %74 = vmatprep.subr.mxu0 0.0
    %75 = vmatpush1.msra.mxu0 0.0
    %76 = vmatprep.subr.mxu0 0.0
    %77 = vmatpush1.msra.mxu0 0.0
    %78 = vmatprep.subr.mxu0 0.0
    %79 = vmatpush1.msra.mxu0 0.0
    %80 = vmatprep.subr.mxu0 0.0
    %81 = vmatpush1.msra.mxu0 0.0
    %82 = vmatprep.subr.mxu0 0.0
    %83 = vmatpush1.msra.mxu0 0.0
    %84 = vmatprep.subr.mxu0 0.0
    %85 = vmatpush1.msra.mxu0 0.0
    %86 = vmatprep.subr.mxu0 0.0
    %87 = vmatpush1.msra.mxu0 0.0
    %88 = vmatprep.subr.mxu0 0.0
    %89 = vmatpush1.msra.mxu0 0.0
    %90 = vmatprep.subr.mxu0 0.0
    %91 = vmatpush1.msra.mxu0 0.0
    %92 = vmatprep.subr.mxu0 0.0
    %93 = vmatpush1.msra.mxu0 0.0
    %94 = vmatprep.subr.mxu0 0.0
    %95 = vmatpush1.msra.mxu0 0.0
    %96 = vmatprep.subr.mxu0 0.0
    %97 = vmatpush1.msra.mxu0 %v56
    %98 = vmatprep.subr.mxu0 0.0
    %99 = vmatpush1.msra.mxu0 %v55
    %100 = vmatprep.subr.mxu0 0.0
    %101 = vmatpush2.msra.mxu0 0.0
    %102 = vmatprep.subr.mxu0 0.0
    %103 = vmatpush2.msra.mxu0 0.0
    %104 = vmatprep.subr.mxu0 0.0
    %105 = vmatpush2.msra.mxu0 0.0
    %106 = vmatprep.subr.mxu0 0.0
    %107 = vmatpush2.msra.mxu0 0.0
    %108 = vmatprep.subr.mxu0 0.0
    %109 = vmatpush2.msra.mxu0 0.0
    %110 = vmatprep.subr.mxu0 0.0
    %111 = vmatpush2.msra.mxu0 0.0
    %112 = vmatprep.subr.mxu0 0.0
    %113 = vmatpush2.msra.mxu0 0.0
    %114 = vmatprep.subr.mxu0 0.0
    %115 = vmatpush2.msra.mxu0 0.0
    %116 = vmatprep.subr.mxu0 0.0
    %117 = vmatpush2.msra.mxu0 0.0
    %118 = vmatprep.subr.mxu0 0.0
    %119 = vmatpush2.msra.mxu0 0.0
    %120 = vmatprep.subr.mxu0 0.0
    %121 = vmatpush2.msra.mxu0 0.0
    %122 = vmatprep.subr.mxu0 0.0
    %123 = vmatpush2.msra.mxu0 0.0
    %124 = vmatprep.subr.mxu0 0.0
    %125 = vmatpush2.msra.mxu0 0.0
    %126 = vmatprep.subr.mxu0 0.0
    %127 = vmatpush2.msra.mxu0 0.0
    %128 = vmatprep.subr.mxu0 0.0
    %129 = vmatpush2.msra.mxu0 0.0
    %130 = vmatprep.subr.mxu0 0.0
    %131 = vmatpush2.msra.mxu0 0.0
    %132 = vmatprep.mubr.f32.mxu0 0.0
    %133 = vmatmul.mubr.f32.gmra.mxu0 %v66
    %v134 = vpop.f32.mrf.mxu0
    %v135 = vadd.f32 %v62, %v134
    %v136 = vpop.f32.mrf.mxu0
    %137 = vdwg.mxu0
    %v138 = vmax.f32 %v135, 0.0
    %v139 = vld [vmem:[#allocation2] sm:$0xff]
    %v140 = vld [vmem:[#allocation2 + $0x8] sm:$0xff]
    %v141 = vld [vmem:[#allocation2 + $0x10] sm:$0xff]
    %v142 = vld [vmem:[#allocation2 + $0x18] sm:$0xff]
    %v143 = vld [vmem:[#allocation2 + $0x20] sm:$0xff]
    %v144 = vld [vmem:[#allocation2 + $0x28] sm:$0xff]
    %v145 = vld [vmem:[#allocation2 + $0x30] sm:$0xff]
    %v146 = vld [vmem:[#allocation2 + $0x38] sm:$0xff]
    %v147 = vld [vmem:[#allocation2 + $0x40] sm:$0xff]
    %v148 = vld [vmem:[#allocation2 + $0x48] sm:$0xff]
    %v149 = vld [vmem:[#allocation2 + $0x50] sm:$0xff]
    %v150 = vld [vmem:[#allocation2 + $0x58] sm:$0xff]
    %v151 = vld [vmem:[#allocation2 + $0x60] sm:$0xff]
    %v152 = vld [vmem:[#allocation2 + $0x68] sm:$0xff]
    %v153 = vld [vmem:[#allocation2 + $0x70] sm:$0xff]
    %v154 = vld [vmem:[#allocation2 + $0x78] sm:$0xff]
    %v155 = vld [vmem:[%s4] sm:$0x1]
    %v157 = vlaneseq
    %v158 = vshrl.u32 %v157, 7
    %v159 = vsub.s32 0, %v158
    %v160 = vrot.slane %v155, %v159
    %162 = vmatprep.subr.mxu0 0.0
    %163 = vmatpush1.msra.mxu0 %v154
    %164 = vmatprep.subr.mxu0 0.0
    %165 = vmatpush1.msra.mxu0 %v153
    %166 = vmatprep.subr.mxu0 0.0
    %167 = vmatpush1.msra.mxu0 %v152
    %168 = vmatprep.subr.mxu0 0.0
    %169 = vmatpush1.msra.mxu0 %v151
    %170 = vmatprep.subr.mxu0 0.0
    %171 = vmatpush1.msra.mxu0 %v150
    %172 = vmatprep.subr.mxu0 0.0
    %173 = vmatpush1.msra.mxu0 %v149
    %174 = vmatprep.subr.mxu0 0.0
    %175 = vmatpush1.msra.mxu0 %v148
    %176 = vmatprep.subr.mxu0 0.0
    %177 = vmatpush1.msra.mxu0 %v147
    %178 = vmatprep.subr.mxu0 0.0
    %179 = vmatpush1.msra.mxu0 %v146
    %180 = vmatprep.subr.mxu0 0.0
    %181 = vmatpush1.msra.mxu0 %v145
    %182 = vmatprep.subr.mxu0 0.0
    %183 = vmatpush1.msra.mxu0 %v144
    %184 = vmatprep.subr.mxu0 0.0
    %185 = vmatpush1.msra.mxu0 %v143
    %186 = vmatprep.subr.mxu0 0.0
    %187 = vmatpush1.msra.mxu0 %v142
    %188 = vmatprep.subr.mxu0 0.0
    %189 = vmatpush1.msra.mxu0 %v141
    %190 = vmatprep.subr.mxu0 0.0
    %191 = vmatpush1.msra.mxu0 %v140
    %192 = vmatprep.subr.mxu0 0.0
    %193 = vmatpush1.msra.mxu0 %v139
    %194 = vmatprep.subr.mxu0 0.0
    %195 = vmatpush2.msra.mxu0 0.0
    %196 = vmatprep.subr.mxu0 0.0
    %197 = vmatpush2.msra.mxu0 0.0
    %198 = vmatprep.subr.mxu0 0.0
    %199 = vmatpush2.msra.mxu0 0.0
    %200 = vmatprep.subr.mxu0 0.0
    %201 = vmatpush2.msra.mxu0 0.0
    %202 = vmatprep.subr.mxu0 0.0
    %203 = vmatpush2.msra.mxu0 0.0
    %204 = vmatprep.subr.mxu0 0.0
    %205 = vmatpush2.msra.mxu0 0.0
    %206 = vmatprep.subr.mxu0 0.0
    %207 = vmatpush2.msra.mxu0 0.0
    %208 = vmatprep.subr.mxu0 0.0
    %209 = vmatpush2.msra.mxu0 0.0
    %210 = vmatprep.subr.mxu0 0.0
    %211 = vmatpush2.msra.mxu0 0.0
    %212 = vmatprep.subr.mxu0 0.0
    %213 = vmatpush2.msra.mxu0 0.0
    %214 = vmatprep.subr.mxu0 0.0
    %215 = vmatpush2.msra.mxu0 0.0
    %216 = vmatprep.subr.mxu0 0.0
    %217 = vmatpush2.msra.mxu0 0.0
    %218 = vmatprep.subr.mxu0 0.0
    %219 = vmatpush2.msra.mxu0 0.0
    %220 = vmatprep.subr.mxu0 0.0
    %221 = vmatpush2.msra.mxu0 0.0
    %222 = vmatprep.subr.mxu0 0.0
    %223 = vmatpush2.msra.mxu0 0.0
    %224 = vmatprep.subr.mxu0 0.0
    %225 = vmatpush2.msra.mxu0 0.0
    %226 = vmatprep.mubr.f32.mxu0 0.0
    %227 = vmatmul.mubr.f32.gmra.mxu0 %v138
    %v228 = vpop.f32.mrf.mxu0
    %v229 = vadd.f32 %v160, %v228
    %v230 = vpop.f32.mrf.mxu0
    %231 = vdwg.mxu0
    %v232 = vmax.f32 %v229, 0.0
    %v233 = vld [vmem:[#allocation4] sm:$0xff]
    %v234 = vld [vmem:[#allocation4 + $0x8] sm:$0xff]
    %v235 = vld [vmem:[#allocation4 + $0x10] sm:$0xff]
    %v236 = vld [vmem:[#allocation4 + $0x18] sm:$0xff]
    %v237 = vld [vmem:[#allocation4 + $0x20] sm:$0xff]
    %v238 = vld [vmem:[#allocation4 + $0x28] sm:$0xff]
    %v239 = vld [vmem:[#allocation4 + $0x30] sm:$0xff]
    %v240 = vld [vmem:[#allocation4 + $0x38] sm:$0xff]
    %v241 = vld [vmem:[#allocation4 + $0x40] sm:$0xff]
    %v242 = vld [vmem:[#allocation4 + $0x48] sm:$0xff]
    %v243 = vld [vmem:[#allocation4 + $0x50] sm:$0xff]
    %v244 = vld [vmem:[#allocation4 + $0x58] sm:$0xff]
    %v245 = vld [vmem:[#allocation4 + $0x60] sm:$0xff]
    %v246 = vld [vmem:[#allocation4 + $0x68] sm:$0xff]
    %v247 = vld [vmem:[#allocation4 + $0x70] sm:$0xff]
    %v248 = vld [vmem:[#allocation4 + $0x78] sm:$0xff]
    %v249 = vld [vmem:[%s6] sm:$0x1]
    %v251 = vlaneseq
    %v252 = vshrl.u32 %v251, 7
    %v253 = vsub.s32 0, %v252
    %v254 = vrot.slane %v249, %v253
    %256 = vmatprep.subr.mxu0 0.0
    %257 = vmatpush1.msra.mxu0 %v248
    %258 = vmatprep.subr.mxu0 0.0
    %259 = vmatpush1.msra.mxu0 %v247
    %260 = vmatprep.subr.mxu0 0.0
    %261 = vmatpush1.msra.mxu0 %v246
    %262 = vmatprep.subr.mxu0 0.0
    %263 = vmatpush1.msra.mxu0 %v245
    %264 = vmatprep.subr.mxu0 0.0
    %265 = vmatpush1.msra.mxu0 %v244
    %266 = vmatprep.subr.mxu0 0.0
    %267 = vmatpush1.msra.mxu0 %v243
    %268 = vmatprep.subr.mxu0 0.0
    %269 = vmatpush1.msra.mxu0 %v242
    %270 = vmatprep.subr.mxu0 0.0
    %271 = vmatpush1.msra.mxu0 %v241
    %272 = vmatprep.subr.mxu0 0.0
    %273 = vmatpush1.msra.mxu0 %v240
    %274 = vmatprep.subr.mxu0 0.0
    %275 = vmatpush1.msra.mxu0 %v239
    %276 = vmatprep.subr.mxu0 0.0
    %277 = vmatpush1.msra.mxu0 %v238
    %278 = vmatprep.subr.mxu0 0.0
    %279 = vmatpush1.msra.mxu0 %v237
    %280 = vmatprep.subr.mxu0 0.0
    %281 = vmatpush1.msra.mxu0 %v236
    %282 = vmatprep.subr.mxu0 0.0
    %283 = vmatpush1.msra.mxu0 %v235
    %284 = vmatprep.subr.mxu0 0.0
    %285 = vmatpush1.msra.mxu0 %v234
    %286 = vmatprep.subr.mxu0 0.0
    %287 = vmatpush1.msra.mxu0 %v233
    %288 = vmatprep.subr.mxu0 0.0
    %289 = vmatpush2.msra.mxu0 0.0
    %290 = vmatprep.subr.mxu0 0.0
    %291 = vmatpush2.msra.mxu0 0.0
    %292 = vmatprep.subr.mxu0 0.0
    %293 = vmatpush2.msra.mxu0 0.0
    %294 = vmatprep.subr.mxu0 0.0
    %295 = vmatpush2.msra.mxu0 0.0
    %296 = vmatprep.subr.mxu0 0.0
    %297 = vmatpush2.msra.mxu0 0.0
    %298 = vmatprep.subr.mxu0 0.0
    %299 = vmatpush2.msra.mxu0 0.0
    %300 = vmatprep.subr.mxu0 0.0
    %301 = vmatpush2.msra.mxu0 0.0
    %302 = vmatprep.subr.mxu0 0.0
    %303 = vmatpush2.msra.mxu0 0.0
    %304 = vmatprep.subr.mxu0 0.0
    %305 = vmatpush2.msra.mxu0 0.0
    %306 = vmatprep.subr.mxu0 0.0
    %307 = vmatpush2.msra.mxu0 0.0
    %308 = vmatprep.subr.mxu0 0.0
    %309 = vmatpush2.msra.mxu0 0.0
    %310 = vmatprep.subr.mxu0 0.0
    %311 = vmatpush2.msra.mxu0 0.0
    %312 = vmatprep.subr.mxu0 0.0
    %313 = vmatpush2.msra.mxu0 0.0
    %314 = vmatprep.subr.mxu0 0.0
    %315 = vmatpush2.msra.mxu0 0.0
    %316 = vmatprep.subr.mxu0 0.0
    %317 = vmatpush2.msra.mxu0 0.0
    %318 = vmatprep.subr.mxu0 0.0
    %319 = vmatpush2.msra.mxu0 0.0
    %320 = vmatprep.mubr.f32.mxu0 0.0
    %321 = vmatmul.mubr.f32.gmra.mxu0 %v232
    %v322 = vpop.f32.mrf.mxu0
    %v323 = vadd.f32 %v254, %v322
    %v324 = vpop.f32.mrf.mxu0
    %325 = vdwg.mxu0
    %326 = vst [vmem:[%s7] sm:$0xff] %v323
    // Predicated region
    $region38: #{net_continuous_actions_forward.1} parent=1 // pred_check
      _
    $region39: #{net_continuous_actions_forward.1} parent=1 // pred_check_branch
      %328 = sbr.rel (0) target = $region41
    $region40: #{net_continuous_actions_forward.1} parent=1 // pred_region
      _
    $region41: #{net_continuous_actions_forward.1} parent=1 // pred_fallthru
      _
    // Predicated region
    $region42: #{net_continuous_actions_forward.1} parent=1 // pred_check
      _
    $region43: #{net_continuous_actions_forward.1} parent=1 // pred_check_branch
      %330 = sbr.rel (0) target = $region45
    $region44: #{net_continuous_actions_forward.1} parent=1 // pred_region
      _
    $region45: #{net_continuous_actions_forward.1} parent=1 // pred_fallthru
      _
    %331 = vsyncpa [#allocation3], 1
    %332 = vsyncpa [#allocation5], 1

</llo_original>
